<compile_context>
chip_gen: v6e
topology: v6e:2x2x1
jax: 0.10.0
libtpu: 0.0.40
codegen_flags: <defaults>
</compile_context>

<pallas_src>
import jax
import jax.numpy as jnp
from jax import lax
from jax.experimental import pallas as pl
from jax.experimental.pallas import tpu as pltpu


def _round_up(x: int, m: int) -> int:
    return ((x + m - 1) // m) * m


def prototype_kernel(h_ref, hn_ref, p_ref, pn_ref, o_ref, acc_ref):
    """One (batch-tile, K-tile) output block; grid axis 2 chunks the hidden dim.

    h_ref : (TB, HC) matmul dtype (bf16 default)  -- activations at time step 0
    hn_ref: (TB, 1)  f32                          -- ||h_b||^2 over the full H (f32)
    p_ref : (KN, HC) matmul dtype                 -- prototype tile
    pn_ref: (1, KN)  f32                          -- ||p_k||^2 over the full H (f32)
    o_ref : (TB, KN) out dtype
    acc_ref: (TB, KN) f32 scratch                 -- cross-term accumulator over H chunks
    """
    l = pl.program_id(2)

    @pl.when(l == 0)
    def _init():
        acc_ref[...] = jnp.zeros_like(acc_ref)

    # Cross term on the MXU: contract both operands over the hidden (lane) axis,
    # f32 accumulation.
    acc_ref[...] += lax.dot_general(
        h_ref[...], p_ref[...],
        dimension_numbers=(((1,), (1,)), ((), ())),
        preferred_element_type=jnp.float32,
    )

    @pl.when(l == pl.num_programs(2) - 1)
    def _finalize():
        # ||h||^2 + ||p||^2 - 2 h.p ; clamp tiny negatives from cancellation.
        sq = jnp.maximum(hn_ref[...] + pn_ref[...] - 2.0 * acc_ref[...], 0.0)
        o_ref[...] = jnp.exp(-sq).astype(o_ref.dtype)  # lane-dense (KN % 128 == 0) store


def prototype_layer_forward(
    x_out,
    prototype,
    *,
    tb: int = 512,            # batch tile rows (v5e/v6e sweet spot; ~256 better on v7x)
    kn_max: int = 512,        # prototype tile (output columns), multiple of 128
    hc_max: int = 2048,       # hidden chunk per grid step, multiple of 128
    matmul_dtype=jnp.bfloat16,
    out_dtype=jnp.float32,
):
    """x_out: (seq, batch, hidden) = LSTM output (the x[0] of the torch tuple).
    prototype: (k, hidden). Returns a: (batch, k) in `out_dtype` (default float32):
        a[b, i] = exp(-||x_out[0, b, :] - prototype[i, :]||^2)
    """
    x_out = jnp.asarray(x_out)
    prototype = jnp.asarray(prototype)

    h0 = x_out[0].astype(jnp.float32)             # only time step 0 is used (d[0, i])
    B, H = h0.shape
    K = prototype.shape[0]
    p32 = prototype.astype(jnp.float32)

    # Row norms in f32 BEFORE any bf16 cast (keeps sq accurate under bf16 cross term).
    h_norm = jnp.sum(h0 * h0, axis=-1, keepdims=True)    # (B, 1)  f32
    p_norm = jnp.sum(p32 * p32, axis=-1)[None, :]         # (1, K)  f32

    # ---- tile / padding geometry (lane axes padded to multiples of 128) ----
    HP = _round_up(H, 128)
    HC = HP if HP <= hc_max else hc_max
    HP = _round_up(HP, HC)

    KP = _round_up(K, 128)
    KN = KP if KP <= kn_max else kn_max
    KP = _round_up(KP, KN)

    m_bytes = jnp.dtype(matmul_dtype).itemsize
    o_bytes = jnp.dtype(out_dtype).itemsize

    TB = min(_round_up(B, 8), _round_up(tb, 8))

    def _block_vmem(tb_):
        # Conservative upper bound: double-buffered h/prototype/out tiles,
        # f32 accumulator scratch, norm vectors.
        return (2 * tb_ * HC * m_bytes + 2 * KN * HC * m_bytes
                + 2 * tb_ * KN * o_bytes + tb_ * KN * 4
                + 2 * tb_ * 4 + 2 * KN * 4)

    VMEM_BUDGET = 32 * 1024 * 1024   # fits every generation (v7x physical = 64 MiB)
    while TB > 8 and _block_vmem(TB) > VMEM_BUDGET:
        TB = _round_up(TB // 2, 8)
    BP = _round_up(B, TB)

    # ---- pad ONLY the ragged dims; skip entirely when already aligned ----
    h = h0.astype(matmul_dtype)
    p = p32.astype(matmul_dtype)
    if (BP, HP) != (B, H):
        h = jnp.pad(h, ((0, BP - B), (0, HP - H)))      # zero cols contribute 0
    if (KP, HP) != (K, H):
        p = jnp.pad(p, ((0, KP - K), (0, HP - H)))
    hn = h_norm if BP == B else jnp.pad(h_norm, ((0, BP - B), (0, 0)))
    pn = p_norm if KP == K else jnp.pad(p_norm, ((0, 0), (0, KP - K)))

    nb, nk, nl = BP // TB, KP // KN, HP // HC
    grid = (nb, nk, nl)

    cost = pl.CostEstimate(
        flops=2 * BP * KP * HP + 4 * BP * KP,
        transcendentals=BP * KP,
        bytes_accessed=(m_bytes * (BP * HP + KP * HP)
                        + 4 * (BP + KP) + o_bytes * BP * KP),
    )
    vmem_limit = min(int(_block_vmem(TB) * 1.5) + (4 << 20), 64 * 1024 * 1024)

    def _build(single_buffer_resident: bool):
        resident_kw = {}
        if single_buffer_resident:
            # Prototype block + its norms never change across the grid -> one buffer.
            resident_kw = dict(pipeline_mode=pl.Buffered(1))
        in_specs = [
            pl.BlockSpec((TB, HC), lambda b, j, l: (b, l)),          # h batch tile
            pl.BlockSpec((TB, 1), lambda b, j, l: (b, 0)),           # ||h||^2
            pl.BlockSpec((KN, HC), lambda b, j, l: (j, l), **resident_kw),  # prototypes
            pl.BlockSpec((1, KN), lambda b, j, l: (0, j), **resident_kw),   # ||p||^2
        ]
        return pl.pallas_call(
            prototype_kernel,
            out_shape=jax.ShapeDtypeStruct((BP, KP), out_dtype),
            grid=grid,
            in_specs=in_specs,
            out_specs=pl.BlockSpec((TB, KN), lambda b, j, l: (b, j)),
            scratch_shapes=[pltpu.VMEM((TB, KN), jnp.float32)],
            compiler_params=pltpu.CompilerParams(
                dimension_semantics=("parallel", "parallel", "arbitrary"),
                vmem_limit_bytes=vmem_limit,
            ),
            cost_estimate=cost,
        )

    proto_resident = (nk == 1 and nl == 1)   # constant index_map -> safe to single-buffer
    if proto_resident:
        try:
            out = _build(True)(h, hn, p, pn)
        except Exception:
            # pipeline_mode / Buffered(1) not supported by this JAX build:
            # fall back to default double buffering (correctness unchanged).
            out = _build(False)(h, hn, p, pn)
    else:
        out = _build(False)(h, hn, p, pn)

    # Padded rows/cols hold finite garbage (exp of a norm) and are sliced off here.
    return out[:B, :K]


if __name__ == "__main__":
    seq, batch, hidden, k = 4, 8, 32, 2

    key = jax.random.PRNGKey(0)
    k_x, k_p = jax.random.split(key)

    # Stand-in for the LSTM output x[0]: (seq, batch, hidden).  Scaled so the squared
    # distances (and therefore exp(-d^2)) sit in a numerically meaningful range.
    x_out = 0.15 * jax.random.normal(k_x, (seq, batch, hidden), dtype=jnp.float32)
    # Analogue of nn.init.uniform_(Tensor(k, hidden)) (scaled to match x).
    prototype = jax.random.uniform(k_p, (k, hidden), minval=0.0, maxval=0.25,
                                   dtype=jnp.float32)

    # Pure-JAX reference (same math as the PyTorch loop: only x[0][0] is used).
    h0 = x_out[0]
    ref = jnp.exp(-jnp.sum((h0[:, None, :] - prototype[None, :, :]) ** 2, axis=-1))

    # Default path: bf16 MXU operands, f32 norms / accumulation / output.
    a = prototype_layer_forward(x_out, prototype)
    a = jax.block_until_ready(a)
    assert a.shape == (batch, k) and a.dtype == jnp.float32, (a.shape, a.dtype)
    assert jnp.allclose(a, ref, rtol=2e-2, atol=2e-3), \
        float(jnp.max(jnp.abs(a - ref)))

    # Exact f32 path (tight tolerance) + ragged batch to exercise the padding logic.
    a32 = prototype_layer_forward(x_out[:, :5], prototype, matmul_dtype=jnp.float32)
    a32 = jax.block_until_ready(a32)
    assert a32.shape == (5, k), a32.shape
    assert jnp.allclose(a32, ref[:5], rtol=1e-4, atol=1e-5), \
        float(jnp.max(jnp.abs(a32 - ref[:5])))

    print("KERNEL_OK")
</pallas_src>

<mosaic_0001>
module attributes {stable_mosaic.version = 11 : i64} {
  func.func @prototype_kernel(%arg0: i32, %arg1: i32, %arg2: i32, %arg3: memref<8x128xbf16, #tpu.memory_space<vmem>>, %arg4: memref<8x1xf32, #tpu.memory_space<vmem>>, %arg5: memref<128x128xbf16, #tpu.memory_space<vmem>>, %arg6: memref<1x128xf32, #tpu.memory_space<vmem>>, %arg7: memref<8x128xf32, #tpu.memory_space<vmem>>, %arg8: memref<8x128xf32, #tpu.memory_space<vmem>>) attributes {dimension_semantics = [#tpu.dimension_semantics<parallel>, #tpu.dimension_semantics<parallel>, #tpu.dimension_semantics<arbitrary>], iteration_bounds = array<i64: 1, 1, 1>, scalar_prefetch = 0 : i64, scratch_operands = 1 : i64, tpu.core_type = #tpu.core_type<tc>, window_params = [{transform_indices = @transform_0, window_bounds = array<i64: 8, 128>}, {transform_indices = @transform_1, window_bounds = array<i64: 8, 1>}, {pipeline_mode = #tpu.pipeline_mode<synchronous>, transform_indices = @transform_2, window_bounds = array<i64: 128, 128>}, {pipeline_mode = #tpu.pipeline_mode<synchronous>, transform_indices = @transform_3, window_bounds = array<i64: 1, 128>}, {transform_indices = @transform_4, window_bounds = array<i64: 8, 128>}]} {
    %c0_i32 = arith.constant 0 : i32
    %0 = arith.cmpi eq, %arg2, %c0_i32 : i32
    %1 = arith.extui %0 : i1 to i32
    %c0_i32_0 = arith.constant 0 : i32
    %2 = arith.cmpi ne, %1, %c0_i32_0 : i32
    scf.if %2 {
      %cst_10 = arith.constant 0.000000e+00 : f32
      %12 = vector.broadcast %cst_10 : f32 to vector<8x128xf32>
      %c0_11 = arith.constant 0 : index
      %c0_12 = arith.constant 0 : index
      %13 = vector.load %arg8[%c0_11, %c0_12] : memref<8x128xf32, #tpu.memory_space<vmem>>, vector<8x128xf32>
      tpu.vector_store %arg8[%c0_11, %c0_12], %12 {strides = array<i32>} : memref<8x128xf32, #tpu.memory_space<vmem>>, vector<8x128xf32>,
    } else {
    }
    %c0 = arith.constant 0 : index
    %c0_1 = arith.constant 0 : index
    %3 = vector.load %arg8[%c0, %c0_1] : memref<8x128xf32, #tpu.memory_space<vmem>>, vector<8x128xf32>
    %c0_2 = arith.constant 0 : index
    %c0_3 = arith.constant 0 : index
    %4 = vector.load %arg3[%c0_2, %c0_3] : memref<8x128xbf16, #tpu.memory_space<vmem>>, vector<8x128xbf16>
    %c0_4 = arith.constant 0 : index
    %c0_5 = arith.constant 0 : index
    %5 = vector.load %arg5[%c0_4, %c0_5] : memref<128x128xbf16, #tpu.memory_space<vmem>>, vector<128x128xbf16>
    %cst = arith.constant dense<0.000000e+00> : vector<8x128xf32>
    %6 = tpu.matmul %4, %5, %cst {dimension_numbers = #tpu.dot_dimension_numbers<[1], [1], [0], [0], [0, 0, 1, 0], [], []>} : vector<8x128xbf16>, vector<128x128xbf16>, vector<8x128xf32> -> vector<8x128xf32>
    %7 = arith.addf %3, %6 : vector<8x128xf32>
    %c0_6 = arith.constant 0 : index
    %c0_7 = arith.constant 0 : index
    %8 = vector.load %arg8[%c0_6, %c0_7] : memref<8x128xf32, #tpu.memory_space<vmem>>, vector<8x128xf32>
    tpu.vector_store %arg8[%c0_6, %c0_7], %7 {strides = array<i32>} : memref<8x128xf32, #tpu.memory_space<vmem>>, vector<8x128xf32>,
    %c0_i32_8 = arith.constant 0 : i32
    %9 = arith.cmpi eq, %arg2, %c0_i32_8 : i32
    %10 = arith.extui %9 : i1 to i32
    %c0_i32_9 = arith.constant 0 : i32
    %11 = arith.cmpi ne, %10, %c0_i32_9 : i32
    scf.if %11 {
      %c0_10 = arith.constant 0 : index
      %c0_11 = arith.constant 0 : index
      %12 = vector.load %arg4[%c0_10, %c0_11] : memref<8x1xf32, #tpu.memory_space<vmem>>, vector<8x1xf32>
      %c0_12 = arith.constant 0 : index
      %c0_13 = arith.constant 0 : index
      %13 = vector.load %arg6[%c0_12, %c0_13] : memref<1x128xf32, #tpu.memory_space<vmem>>, vector<1x128xf32>
      %14 = vector.broadcast %12 : vector<8x1xf32> to vector<8x128xf32>
      %15 = vector.broadcast %13 : vector<1x128xf32> to vector<8x128xf32>
      %16 = arith.addf %14, %15 : vector<8x128xf32>
      %c0_14 = arith.constant 0 : index
      %c0_15 = arith.constant 0 : index
      %17 = vector.load %arg8[%c0_14, %c0_15] : memref<8x128xf32, #tpu.memory_space<vmem>>, vector<8x128xf32>
      %cst_16 = arith.constant 2.000000e+00 : f32
      %18 = vector.broadcast %cst_16 : f32 to vector<8x128xf32>
      %19 = arith.mulf %18, %17 : vector<8x128xf32>
      %20 = arith.subf %16, %19 : vector<8x128xf32>
      %cst_17 = arith.constant 0.000000e+00 : f32
      %21 = vector.broadcast %cst_17 : f32 to vector<8x128xf32>
      %22 = arith.maximumf %20, %21 : vector<8x128xf32>
      %cst_18 = arith.constant 0.000000e+00 : f32
      %23 = vector.broadcast %cst_18 : f32 to vector<8x128xf32>
      %24 = arith.subf %23, %22 : vector<8x128xf32>
      %25 = math.exp %24 : vector<8x128xf32>
      %c0_19 = arith.constant 0 : index
      %c0_20 = arith.constant 0 : index
      %26 = vector.load %arg7[%c0_19, %c0_20] : memref<8x128xf32, #tpu.memory_space<vmem>>, vector<8x128xf32>
      tpu.vector_store %arg7[%c0_19, %c0_20], %25 {strides = array<i32>} : memref<8x128xf32, #tpu.memory_space<vmem>>, vector<8x128xf32>,
    } else {
    }
    return
  }
  func.func @transform_0(%arg0: i32, %arg1: i32, %arg2: i32) -> (i32, i32) {
    %c0_i32 = arith.constant 0 : i32
    return %arg0, %arg2 : i32, i32
  }
  func.func @transform_1(%arg0: i32, %arg1: i32, %arg2: i32) -> (i32, i32) {
    %c0_i32 = arith.constant 0 : i32
    %c0_i32_0 = arith.constant 0 : i32
    return %arg0, %c0_i32 : i32, i32
  }
  func.func @transform_2(%arg0: i32, %arg1: i32, %arg2: i32) -> (i32, i32) {
    %c0_i32 = arith.constant 0 : i32
    return %arg1, %arg2 : i32, i32
  }
  func.func @transform_3(%arg0: i32, %arg1: i32, %arg2: i32) -> (i32, i32) {
    %c0_i32 = arith.constant 0 : i32
    %c0_i32_0 = arith.constant 0 : i32
    return %c0_i32, %arg1 : i32, i32
  }
  func.func @transform_4(%arg0: i32, %arg1: i32, %arg2: i32) -> (i32, i32) {
    %c0_i32 = arith.constant 0 : i32
    return %arg0, %arg1 : i32, i32
  }
}

module attributes {stable_mosaic.version = 11 : i64} {
  func.func @prototype_kernel(%arg0: i32, %arg1: i32, %arg2: i32, %arg3: memref<8x128xbf16, #tpu.memory_space<vmem>>, %arg4: memref<8x1xf32, #tpu.memory_space<vmem>>, %arg5: memref<128x128xbf16, #tpu.memory_space<vmem>>, %arg6: memref<1x128xf32, #tpu.memory_space<vmem>>, %arg7: memref<8x128xf32, #tpu.memory_space<vmem>>, %arg8: memref<8x128xf32, #tpu.memory_space<vmem>>) attributes {dimension_semantics = [#tpu.dimension_semantics<parallel>, #tpu.dimension_semantics<parallel>, #tpu.dimension_semantics<arbitrary>], iteration_bounds = array<i64: 1, 1, 1>, scalar_prefetch = 0 : i64, scratch_operands = 1 : i64, tpu.core_type = #tpu.core_type<tc>, window_params = [{transform_indices = @transform_0, window_bounds = array<i64: 8, 128>}, {transform_indices = @transform_1, window_bounds = array<i64: 8, 1>}, {transform_indices = @transform_2, window_bounds = array<i64: 128, 128>}, {transform_indices = @transform_3, window_bounds = array<i64: 1, 128>}, {transform_indices = @transform_4, window_bounds = array<i64: 8, 128>}]} {
    %c0_i32 = arith.constant 0 : i32
    %0 = arith.cmpi eq, %arg2, %c0_i32 : i32
    %1 = arith.extui %0 : i1 to i32
    %c0_i32_0 = arith.constant 0 : i32
    %2 = arith.cmpi ne, %1, %c0_i32_0 : i32
    scf.if %2 {
      %cst_10 = arith.constant 0.000000e+00 : f32
      %12 = vector.broadcast %cst_10 : f32 to vector<8x128xf32>
      %c0_11 = arith.constant 0 : index
      %c0_12 = arith.constant 0 : index
      %13 = vector.load %arg8[%c0_11, %c0_12] : memref<8x128xf32, #tpu.memory_space<vmem>>, vector<8x128xf32>
      tpu.vector_store %arg8[%c0_11, %c0_12], %12 {strides = array<i32>} : memref<8x128xf32, #tpu.memory_space<vmem>>, vector<8x128xf32>,
    } else {
    }
    %c0 = arith.constant 0 : index
    %c0_1 = arith.constant 0 : index
    %3 = vector.load %arg8[%c0, %c0_1] : memref<8x128xf32, #tpu.memory_space<vmem>>, vector<8x128xf32>
    %c0_2 = arith.constant 0 : index
    %c0_3 = arith.constant 0 : index
    %4 = vector.load %arg3[%c0_2, %c0_3] : memref<8x128xbf16, #tpu.memory_space<vmem>>, vector<8x128xbf16>
    %c0_4 = arith.constant 0 : index
    %c0_5 = arith.constant 0 : index
    %5 = vector.load %arg5[%c0_4, %c0_5] : memref<128x128xbf16, #tpu.memory_space<vmem>>, vector<128x128xbf16>
    %cst = arith.constant dense<0.000000e+00> : vector<8x128xf32>
    %6 = tpu.matmul %4, %5, %cst {dimension_numbers = #tpu.dot_dimension_numbers<[1], [1], [0], [0], [0, 0, 1, 0], [], []>} : vector<8x128xbf16>, vector<128x128xbf16>, vector<8x128xf32> -> vector<8x128xf32>
    %7 = arith.addf %3, %6 : vector<8x128xf32>
    %c0_6 = arith.constant 0 : index
    %c0_7 = arith.constant 0 : index
    %8 = vector.load %arg8[%c0_6, %c0_7] : memref<8x128xf32, #tpu.memory_space<vmem>>, vector<8x128xf32>
    tpu.vector_store %arg8[%c0_6, %c0_7], %7 {strides = array<i32>} : memref<8x128xf32, #tpu.memory_space<vmem>>, vector<8x128xf32>,
    %c0_i32_8 = arith.constant 0 : i32
    %9 = arith.cmpi eq, %arg2, %c0_i32_8 : i32
    %10 = arith.extui %9 : i1 to i32
    %c0_i32_9 = arith.constant 0 : i32
    %11 = arith.cmpi ne, %10, %c0_i32_9 : i32
    scf.if %11 {
      %c0_10 = arith.constant 0 : index
      %c0_11 = arith.constant 0 : index
      %12 = vector.load %arg4[%c0_10, %c0_11] : memref<8x1xf32, #tpu.memory_space<vmem>>, vector<8x1xf32>
      %c0_12 = arith.constant 0 : index
      %c0_13 = arith.constant 0 : index
      %13 = vector.load %arg6[%c0_12, %c0_13] : memref<1x128xf32, #tpu.memory_space<vmem>>, vector<1x128xf32>
      %14 = vector.broadcast %12 : vector<8x1xf32> to vector<8x128xf32>
      %15 = vector.broadcast %13 : vector<1x128xf32> to vector<8x128xf32>
      %16 = arith.addf %14, %15 : vector<8x128xf32>
      %c0_14 = arith.constant 0 : index
      %c0_15 = arith.constant 0 : index
      %17 = vector.load %arg8[%c0_14, %c0_15] : memref<8x128xf32, #tpu.memory_space<vmem>>, vector<8x128xf32>
      %cst_16 = arith.constant 2.000000e+00 : f32
      %18 = vector.broadcast %cst_16 : f32 to vector<8x128xf32>
      %19 = arith.mulf %18, %17 : vector<8x128xf32>
      %20 = arith.subf %16, %19 : vector<8x128xf32>
      %cst_17 = arith.constant 0.000000e+00 : f32
      %21 = vector.broadcast %cst_17 : f32 to vector<8x128xf32>
      %22 = arith.maximumf %20, %21 : vector<8x128xf32>
      %cst_18 = arith.constant 0.000000e+00 : f32
      %23 = vector.broadcast %cst_18 : f32 to vector<8x128xf32>
      %24 = arith.subf %23, %22 : vector<8x128xf32>
      %25 = math.exp %24 : vector<8x128xf32>
      %c0_19 = arith.constant 0 : index
      %c0_20 = arith.constant 0 : index
      %26 = vector.load %arg7[%c0_19, %c0_20] : memref<8x128xf32, #tpu.memory_space<vmem>>, vector<8x128xf32>
      tpu.vector_store %arg7[%c0_19, %c0_20], %25 {strides = array<i32>} : memref<8x128xf32, #tpu.memory_space<vmem>>, vector<8x128xf32>,
    } else {
    }
    return
  }
  func.func @transform_0(%arg0: i32, %arg1: i32, %arg2: i32) -> (i32, i32) {
    %c0_i32 = arith.constant 0 : i32
    return %arg0, %arg2 : i32, i32
  }
  func.func @transform_1(%arg0: i32, %arg1: i32, %arg2: i32) -> (i32, i32) {
    %c0_i32 = arith.constant 0 : i32
    %c0_i32_0 = arith.constant 0 : i32
    return %arg0, %c0_i32 : i32, i32
  }
  func.func @transform_2(%arg0: i32, %arg1: i32, %arg2: i32) -> (i32, i32) {
    %c0_i32 = arith.constant 0 : i32
    return %arg1, %arg2 : i32, i32
  }
  func.func @transform_3(%arg0: i32, %arg1: i32, %arg2: i32) -> (i32, i32) {
    %c0_i32 = arith.constant 0 : i32
    %c0_i32_0 = arith.constant 0 : i32
    return %c0_i32, %arg1 : i32, i32
  }
  func.func @transform_4(%arg0: i32, %arg1: i32, %arg2: i32) -> (i32, i32) {
    %c0_i32 = arith.constant 0 : i32
    return %arg0, %arg1 : i32, i32
  }
}

</mosaic_0001>

<llo_original>
// kernel: tpu_custom_call.1
$region0: #{tpu_custom_call.1}
  #allocation0 [shape = 'u32[]', space=smem, size = 0x4, offset = 0x4, fixed_abs, tag = 'smem constant byte address 0x4 - core index']
  #allocation1 [shape = 'u32[144,128]{1,0:T(1,128)}', space=vmem, size = 0x12000, scoped, tag = 'internal scratch']
  #allocation2 [shape = 'f32[8,128]{1,0:T(8,128)}', space=vmem, size = 0x1000, scoped, tag = 'scratch operand']
  %s0 = inlined_call_operand.vmem [shape: bf16[8,128], index: 0, kind: input, shape index: {}]
  %s1 = inlined_call_operand.vmem [shape: f32[8,1], index: 1, kind: input, shape index: {}]
  %s2 = inlined_call_operand.hbm [shape: bf16[128,128], index: 2, kind: input, shape index: {}]
  %s3 = inlined_call_operand.vmem [shape: f32[1,128], index: 3, kind: input, shape index: {}]
  %s4 = inlined_call_operand.hbm [shape: f32[8,128], index: 4, kind: output, shape index: {}]
  %s5 = sld [smem:[#allocation0]]
  $region38: #{tpu_custom_call.1} parent=0
    _
  %s7 = ssub.s32 1, %s5
  %s8 = scalar_select 0, %s7, %s5
  $region1: #{tpu_custom_call.1} parent=0
    #allocation3 [shape = 'u8[32768]{0}', space=vmem, size = 0x8000, scoped, tag = 'input window, operand 2, single buffered']
    #allocation4 [shape = 's32[1]{0}', space=sflag, size = 0x4, scoped, tag = 'scoped memory for tpu_custom_call.1']
    #allocation5 [shape = 's32[1]{0}', space=sflag, size = 0x4, scoped, tag = 'scoped memory for tpu_custom_call.1']
    #allocation6 [shape = 'u8[4096]{0}', space=vmem, size = 0x1000, scoped, tag = 'output window, operand 0, single buffered']
    %9 = vsyncpa [#allocation4], 0
    %10 = vsyncpa [#allocation5], 0
    // Predicated region
    $region2: #{tpu_custom_call.1} parent=1 // pred_check
      _
    $region3: #{tpu_custom_call.1} parent=1 // pred_check_branch
      %12 = sbr.rel (0) target = $region5
    $region4: #{tpu_custom_call.1} parent=1 // pred_region
      _
    $region5: #{tpu_custom_call.1} parent=1 // pred_fallthru
      _
    // Predicated region
    $region6: #{tpu_custom_call.1} parent=1 // pred_check
      _
    $region7: #{tpu_custom_call.1} parent=1 // pred_check_branch
      %14 = sbr.rel (0) target = $region9
    $region8: #{tpu_custom_call.1} parent=1 // pred_region
      _
    $region9: #{tpu_custom_call.1} parent=1 // pred_fallthru
      _
    // Predicated region
    $region10: #{tpu_custom_call.1} parent=1 // pred_check
      _
    $region11: #{tpu_custom_call.1} parent=1 // pred_check_branch
      %16 = sbr.rel (0) target = $region13
    $region12: #{tpu_custom_call.1} parent=1 // pred_region
      %s18 = ssub.s32 1024, 1024
      %19 = vsyncadd [#allocation4], %s18
      %s20 = sshll.u32 [#allocation3], 4
      %s21 = int_to_ptr.vmem [resolvable:$true] %s20
      %26 = dma.hbm_to_vmem [thread:$0]  %s2, 1024, %s21, [#allocation4], 64, 64, 4
    $region13: #{tpu_custom_call.1} parent=1 // pred_fallthru
      _
    // Predicated region
    $region14: #{tpu_custom_call.1} parent=1 // pred_check
      _
    $region15: #{tpu_custom_call.1} parent=1 // pred_check_branch
      %28 = sbr.rel (0) target = $region17
    $region16: #{tpu_custom_call.1} parent=1 // pred_region
      _
    $region17: #{tpu_custom_call.1} parent=1 // pred_fallthru
      _
    // Predicated region
    $region18: #{tpu_custom_call.1} parent=1 // pred_check
      _
    $region19: #{tpu_custom_call.1} parent=1 // pred_check_branch
      %30 = sbr.rel (0) target = $region21
    $region20: #{tpu_custom_call.1} parent=1 // pred_region
      %31 = dma.done [#allocation4], 1024
    $region21: #{tpu_custom_call.1} parent=1 // pred_fallthru
      _
    %p33 = scmp.eq.s32.totalorder 0, 0
    // Predicated region
    $region22: #{tpu_custom_call.1} parent=1 // pred_check
      %p34 = pneg %p33
    $region23: #{tpu_custom_call.1} parent=1 // pred_check_branch
      %36 = sbr.rel (%p34) target = $region25
    $region24: #{tpu_custom_call.1} parent=1 // pred_region
      %37 = vst [vmem:[#allocation2] sm:$0xff] 0.0
    $region25: #{tpu_custom_call.1} parent=1 // pred_fallthru
      _
    %v38 = vld [vmem:[#allocation2] sm:$0xff]
    %v39 = vld [vmem:[%s0] sm:$0xf]
    %v40 = vld [vmem:[#allocation3] sm:$0xf]
    %v41 = vld [vmem:[#allocation3 + $0x4] sm:$0xf]
    %v42 = vld [vmem:[#allocation3 + $0x8] sm:$0xf]
    %v43 = vld [vmem:[#allocation3 + $0xc] sm:$0xf]
    %v44 = vld [vmem:[#allocation3 + $0x10] sm:$0xf]
    %v45 = vld [vmem:[#allocation3 + $0x14] sm:$0xf]
    %v46 = vld [vmem:[#allocation3 + $0x18] sm:$0xf]
    %v47 = vld [vmem:[#allocation3 + $0x1c] sm:$0xf]
    %v48 = vld [vmem:[#allocation3 + $0x20] sm:$0xf]
    %v49 = vld [vmem:[#allocation3 + $0x24] sm:$0xf]
    %v50 = vld [vmem:[#allocation3 + $0x28] sm:$0xf]
    %v51 = vld [vmem:[#allocation3 + $0x2c] sm:$0xf]
    %v52 = vld [vmem:[#allocation3 + $0x30] sm:$0xf]
    %v53 = vld [vmem:[#allocation3 + $0x34] sm:$0xf]
    %v54 = vld [vmem:[#allocation3 + $0x38] sm:$0xf]
    %v55 = vld [vmem:[#allocation3 + $0x3c] sm:$0xf]
    %v72 = vunpack.c.l.b16 %v40
    %v73 = vunpack.c.l.b16 %v41
    %v74 = vunpack.c.l.b16 %v42
    %v75 = vunpack.c.l.b16 %v43
    %v76 = vunpack.c.l.b16 %v44
    %v77 = vunpack.c.l.b16 %v45
    %v78 = vunpack.c.l.b16 %v46
    %v79 = vunpack.c.l.b16 %v47
    %v80 = vunpack.c.l.b16 %v48
    %v81 = vunpack.c.l.b16 %v49
    %v82 = vunpack.c.l.b16 %v50
    %v83 = vunpack.c.l.b16 %v51
    %v84 = vunpack.c.l.b16 %v52
    %v85 = vunpack.c.l.b16 %v53
    %v86 = vunpack.c.l.b16 %v54
    %v87 = vunpack.c.l.b16 %v55
    %v88 = vpack.c.b16 %v73, %v72
    %v89 = vpack.c.b16 %v75, %v74
    %v90 = vpack.c.b16 %v77, %v76
    %v91 = vpack.c.b16 %v79, %v78
    %v92 = vpack.c.b16 %v81, %v80
    %v93 = vpack.c.b16 %v83, %v82
    %v94 = vpack.c.b16 %v85, %v84
    %v95 = vpack.c.b16 %v87, %v86
    %104 = vmatprep.subr.bf16.mxu0 0
    %105 = vmatpush1.bf16.xpose.msra.mxu0 %v95
    %106 = vmatprep.subr.bf16.mxu0 0
    %107 = vmatpush1.bf16.xpose.msra.mxu0 %v94
    %108 = vmatprep.subr.bf16.mxu0 0
    %109 = vmatpush1.bf16.xpose.msra.mxu0 %v93
    %110 = vmatprep.subr.bf16.mxu0 0
    %111 = vmatpush1.bf16.xpose.msra.mxu0 %v92
    %112 = vmatprep.subr.bf16.mxu0 0
    %113 = vmatpush1.bf16.xpose.msra.mxu0 %v91
    %114 = vmatprep.subr.bf16.mxu0 0
    %115 = vmatpush1.bf16.xpose.msra.mxu0 %v90
    %116 = vmatprep.subr.bf16.mxu0 0
    %117 = vmatpush1.bf16.xpose.msra.mxu0 %v89
    %118 = vmatprep.subr.bf16.mxu0 0
    %119 = vmatpush1.bf16.xpose.msra.mxu0 %v88
    %120 = vmatprep.subr.bf16.mxu0 0
    %121 = vmatpush2.bf16.xpose.msra.mxu0 0
    %122 = vmatprep.subr.bf16.mxu0 0
    %123 = vmatpush2.bf16.xpose.msra.mxu0 0
    %124 = vmatprep.subr.bf16.mxu0 0
    %125 = vmatpush2.bf16.xpose.msra.mxu0 0
    %126 = vmatprep.subr.bf16.mxu0 0
    %127 = vmatpush2.bf16.xpose.msra.mxu0 0
    %128 = vmatprep.subr.bf16.mxu0 0
    %129 = vmatpush2.bf16.xpose.msra.mxu0 0
    %130 = vmatprep.subr.bf16.mxu0 0
    %131 = vmatpush2.bf16.xpose.msra.mxu0 0
    %132 = vmatprep.subr.bf16.mxu0 0
    %133 = vmatpush2.bf16.xpose.msra.mxu0 0
    %134 = vmatprep.subr.bf16.mxu0 0
    %135 = vmatpush2.bf16.xpose.msra.mxu0 0
    %136 = vmatprep.mubr.bf16.mxu0 0
    %137 = vmatmul.mubr.bf16.gmra.mxu0 %v39
    %v138 = vpop.f32.mrf.mxu0
    %v139 = vadd.f32 0.0, %v138
    %v140 = vpop.f32.mrf.mxu0
    %v141 = vpop.f32.mrf.mxu0
    %v142 = vpop.f32.mrf.mxu0
    %143 = vdwg.mxu0
    %v144 = vadd.f32 %v38, %v139
    %145 = vst [vmem:[#allocation2] sm:$0xff] %v144
    // Predicated region
    $region26: #{tpu_custom_call.1} parent=1 // pred_check
      %p146 = pneg %p33
    $region27: #{tpu_custom_call.1} parent=1 // pred_check_branch
      %148 = sbr.rel (%p146) target = $region29
    $region28: #{tpu_custom_call.1} parent=1 // pred_region
      %v149 = vld [vmem:[%s1] sm:$0xff]
      %v150 = vld [vmem:[%s3] sm:$0x1]
      %152 = vset.pattern.permute.xlu0 0
      %153 = vperm.xlu0 %152, %v149
      %v154 = vpop.permute.xlu0 %153
      %v157 = vlaneseq
      %v158 = vshrl.u32 %v157, 7
      %v159 = vsub.s32 0, %v158
      %v160 = vrot.slane %v150, %v159
      %v162 = vadd.f32 %v154, %v160
      %v163 = vld [vmem:[#allocation2] sm:$0xff]
      %v164 = vmul.f32 %v163, 2.0
      %v165 = vsub.f32 %v162, %v164
      %v166 = vmax.f32 %v165, 0.0
      %v167 = vsub.f32 0.0, %v166
      %v168 = vmul.f32 %v167, 1.442695
      %v169 = vpow.pop %v168
      %170 = vst [vmem:[#allocation6] sm:$0xff] %v169
    $region29: #{tpu_custom_call.1} parent=1 // pred_fallthru
      _
    // Predicated region
    $region30: #{tpu_custom_call.1} parent=1 // pred_check
      _
    $region31: #{tpu_custom_call.1} parent=1 // pred_check_branch
      %172 = sbr.rel (0) target = $region33
    $region32: #{tpu_custom_call.1} parent=1 // pred_region
      %s174 = ssub.s32 128, 128
      %175 = vsyncadd [#allocation5], %s174
      %s177 = sshll.u32 [#allocation6], 4
      %s178 = int_to_ptr.vmem [resolvable:$true] %s177
      %180 = dma.vmem_to_hbm [thread:$0]  %s178, 128, %s4, [#allocation5]
    $region33: #{tpu_custom_call.1} parent=1 // pred_fallthru
      _
    // Predicated region
    $region34: #{tpu_custom_call.1} parent=1 // pred_check
      _
    $region35: #{tpu_custom_call.1} parent=1 // pred_check_branch
      %182 = sbr.rel (0) target = $region37
    $region36: #{tpu_custom_call.1} parent=1 // pred_region
      %183 = dma.done [#allocation5], 128
    $region37: #{tpu_custom_call.1} parent=1 // pred_fallthru
      _
    %184 = vsyncpa [#allocation4], 1
    %185 = vsyncpa [#allocation5], 1

// kernel: tpu_custom_call.1
$region0: #{tpu_custom_call.1}
  #allocation0 [shape = 'u32[]', space=smem, size = 0x4, offset = 0x4, fixed_abs, tag = 'smem constant byte address 0x4 - core index']
  #allocation1 [shape = 'u32[144,128]{1,0:T(1,128)}', space=vmem, size = 0x12000, scoped, tag = 'internal scratch']
  #allocation2 [shape = 'f32[8,128]{1,0:T(8,128)}', space=vmem, size = 0x1000, scoped, tag = 'scratch operand']
  %s0 = inlined_call_operand.vmem [shape: bf16[8,128], index: 0, kind: input, shape index: {}]
  %s1 = inlined_call_operand.vmem [shape: f32[8,1], index: 1, kind: input, shape index: {}]
  %s2 = inlined_call_operand.hbm [shape: bf16[128,128], index: 2, kind: input, shape index: {}]
  %s3 = inlined_call_operand.vmem [shape: f32[1,128], index: 3, kind: input, shape index: {}]
  %s4 = inlined_call_operand.hbm [shape: f32[8,128], index: 4, kind: output, shape index: {}]
  %s5 = sld [smem:[#allocation0]]
  $region38: #{tpu_custom_call.1} parent=0
    _
  %s7 = ssub.s32 1, %s5
  %s8 = scalar_select 0, %s7, %s5
  $region1: #{tpu_custom_call.1} parent=0
    #allocation3 [shape = 'u8[32768]{0}', space=vmem, size = 0x8000, scoped, tag = 'input window, operand 2, single buffered']
    #allocation4 [shape = 's32[1]{0}', space=sflag, size = 0x4, scoped, tag = 'scoped memory for tpu_custom_call.1']
    #allocation5 [shape = 's32[1]{0}', space=sflag, size = 0x4, scoped, tag = 'scoped memory for tpu_custom_call.1']
    #allocation6 [shape = 'u8[4096]{0}', space=vmem, size = 0x1000, scoped, tag = 'output window, operand 0, single buffered']
    %9 = vsyncpa [#allocation4], 0
    %10 = vsyncpa [#allocation5], 0
    // Predicated region
    $region2: #{tpu_custom_call.1} parent=1 // pred_check
      _
    $region3: #{tpu_custom_call.1} parent=1 // pred_check_branch
      %12 = sbr.rel (0) target = $region5
    $region4: #{tpu_custom_call.1} parent=1 // pred_region
      _
    $region5: #{tpu_custom_call.1} parent=1 // pred_fallthru
      _
    // Predicated region
    $region6: #{tpu_custom_call.1} parent=1 // pred_check
      _
    $region7: #{tpu_custom_call.1} parent=1 // pred_check_branch
      %14 = sbr.rel (0) target = $region9
    $region8: #{tpu_custom_call.1} parent=1 // pred_region
      _
    $region9: #{tpu_custom_call.1} parent=1 // pred_fallthru
      _
    // Predicated region
    $region10: #{tpu_custom_call.1} parent=1 // pred_check
      _
    $region11: #{tpu_custom_call.1} parent=1 // pred_check_branch
      %16 = sbr.rel (0) target = $region13
    $region12: #{tpu_custom_call.1} parent=1 // pred_region
      %s18 = ssub.s32 1024, 1024
      %19 = vsyncadd [#allocation4], %s18
      %s20 = sshll.u32 [#allocation3], 4
      %s21 = int_to_ptr.vmem [resolvable:$true] %s20
      %26 = dma.hbm_to_vmem [thread:$0]  %s2, 1024, %s21, [#allocation4], 64, 64, 4
    $region13: #{tpu_custom_call.1} parent=1 // pred_fallthru
      _
    // Predicated region
    $region14: #{tpu_custom_call.1} parent=1 // pred_check
      _
    $region15: #{tpu_custom_call.1} parent=1 // pred_check_branch
      %28 = sbr.rel (0) target = $region17
    $region16: #{tpu_custom_call.1} parent=1 // pred_region
      _
    $region17: #{tpu_custom_call.1} parent=1 // pred_fallthru
      _
    // Predicated region
    $region18: #{tpu_custom_call.1} parent=1 // pred_check
      _
    $region19: #{tpu_custom_call.1} parent=1 // pred_check_branch
      %30 = sbr.rel (0) target = $region21
    $region20: #{tpu_custom_call.1} parent=1 // pred_region
      %31 = dma.done [#allocation4], 1024
    $region21: #{tpu_custom_call.1} parent=1 // pred_fallthru
      _
    %p33 = scmp.eq.s32.totalorder 0, 0
    // Predicated region
    $region22: #{tpu_custom_call.1} parent=1 // pred_check
      %p34 = pneg %p33
    $region23: #{tpu_custom_call.1} parent=1 // pred_check_branch
      %36 = sbr.rel (%p34) target = $region25
    $region24: #{tpu_custom_call.1} parent=1 // pred_region
      %37 = vst [vmem:[#allocation2] sm:$0xff] 0.0
    $region25: #{tpu_custom_call.1} parent=1 // pred_fallthru
      _
    %v38 = vld [vmem:[#allocation2] sm:$0xff]
    %v39 = vld [vmem:[%s0] sm:$0xf]
    %v40 = vld [vmem:[#allocation3] sm:$0xf]
    %v41 = vld [vmem:[#allocation3 + $0x4] sm:$0xf]
    %v42 = vld [vmem:[#allocation3 + $0x8] sm:$0xf]
    %v43 = vld [vmem:[#allocation3 + $0xc] sm:$0xf]
    %v44 = vld [vmem:[#allocation3 + $0x10] sm:$0xf]
    %v45 = vld [vmem:[#allocation3 + $0x14] sm:$0xf]
    %v46 = vld [vmem:[#allocation3 + $0x18] sm:$0xf]
    %v47 = vld [vmem:[#allocation3 + $0x1c] sm:$0xf]
    %v48 = vld [vmem:[#allocation3 + $0x20] sm:$0xf]
    %v49 = vld [vmem:[#allocation3 + $0x24] sm:$0xf]
    %v50 = vld [vmem:[#allocation3 + $0x28] sm:$0xf]
    %v51 = vld [vmem:[#allocation3 + $0x2c] sm:$0xf]
    %v52 = vld [vmem:[#allocation3 + $0x30] sm:$0xf]
    %v53 = vld [vmem:[#allocation3 + $0x34] sm:$0xf]
    %v54 = vld [vmem:[#allocation3 + $0x38] sm:$0xf]
    %v55 = vld [vmem:[#allocation3 + $0x3c] sm:$0xf]
    %v72 = vunpack.c.l.b16 %v40
    %v73 = vunpack.c.l.b16 %v41
    %v74 = vunpack.c.l.b16 %v42
    %v75 = vunpack.c.l.b16 %v43
    %v76 = vunpack.c.l.b16 %v44
    %v77 = vunpack.c.l.b16 %v45
    %v78 = vunpack.c.l.b16 %v46
    %v79 = vunpack.c.l.b16 %v47
    %v80 = vunpack.c.l.b16 %v48
    %v81 = vunpack.c.l.b16 %v49
    %v82 = vunpack.c.l.b16 %v50
    %v83 = vunpack.c.l.b16 %v51
    %v84 = vunpack.c.l.b16 %v52
    %v85 = vunpack.c.l.b16 %v53
    %v86 = vunpack.c.l.b16 %v54
    %v87 = vunpack.c.l.b16 %v55
    %v88 = vpack.c.b16 %v73, %v72
    %v89 = vpack.c.b16 %v75, %v74
    %v90 = vpack.c.b16 %v77, %v76
    %v91 = vpack.c.b16 %v79, %v78
    %v92 = vpack.c.b16 %v81, %v80
    %v93 = vpack.c.b16 %v83, %v82
    %v94 = vpack.c.b16 %v85, %v84
    %v95 = vpack.c.b16 %v87, %v86
    %104 = vmatprep.subr.bf16.mxu0 0
    %105 = vmatpush1.bf16.xpose.msra.mxu0 %v95
    %106 = vmatprep.subr.bf16.mxu0 0
    %107 = vmatpush1.bf16.xpose.msra.mxu0 %v94
    %108 = vmatprep.subr.bf16.mxu0 0
    %109 = vmatpush1.bf16.xpose.msra.mxu0 %v93
    %110 = vmatprep.subr.bf16.mxu0 0
    %111 = vmatpush1.bf16.xpose.msra.mxu0 %v92
    %112 = vmatprep.subr.bf16.mxu0 0
    %113 = vmatpush1.bf16.xpose.msra.mxu0 %v91
    %114 = vmatprep.subr.bf16.mxu0 0
    %115 = vmatpush1.bf16.xpose.msra.mxu0 %v90
    %116 = vmatprep.subr.bf16.mxu0 0
    %117 = vmatpush1.bf16.xpose.msra.mxu0 %v89
    %118 = vmatprep.subr.bf16.mxu0 0
    %119 = vmatpush1.bf16.xpose.msra.mxu0 %v88
    %120 = vmatprep.subr.bf16.mxu0 0
    %121 = vmatpush2.bf16.xpose.msra.mxu0 0
    %122 = vmatprep.subr.bf16.mxu0 0
    %123 = vmatpush2.bf16.xpose.msra.mxu0 0
    %124 = vmatprep.subr.bf16.mxu0 0
    %125 = vmatpush2.bf16.xpose.msra.mxu0 0
    %126 = vmatprep.subr.bf16.mxu0 0
    %127 = vmatpush2.bf16.xpose.msra.mxu0 0
    %128 = vmatprep.subr.bf16.mxu0 0
    %129 = vmatpush2.bf16.xpose.msra.mxu0 0
    %130 = vmatprep.subr.bf16.mxu0 0
    %131 = vmatpush2.bf16.xpose.msra.mxu0 0
    %132 = vmatprep.subr.bf16.mxu0 0
    %133 = vmatpush2.bf16.xpose.msra.mxu0 0
    %134 = vmatprep.subr.bf16.mxu0 0
    %135 = vmatpush2.bf16.xpose.msra.mxu0 0
    %136 = vmatprep.mubr.bf16.mxu0 0
    %137 = vmatmul.mubr.bf16.gmra.mxu0 %v39
    %v138 = vpop.f32.mrf.mxu0
    %v139 = vadd.f32 0.0, %v138
    %v140 = vpop.f32.mrf.mxu0
    %v141 = vpop.f32.mrf.mxu0
    %v142 = vpop.f32.mrf.mxu0
    %143 = vdwg.mxu0
    %v144 = vadd.f32 %v38, %v139
    %145 = vst [vmem:[#allocation2] sm:$0xff] %v144
    // Predicated region
    $region26: #{tpu_custom_call.1} parent=1 // pred_check
      %p146 = pneg %p33
    $region27: #{tpu_custom_call.1} parent=1 // pred_check_branch
      %148 = sbr.rel (%p146) target = $region29
    $region28: #{tpu_custom_call.1} parent=1 // pred_region
      %v149 = vld [vmem:[%s1] sm:$0xff]
      %v150 = vld [vmem:[%s3] sm:$0x1]
      %152 = vset.pattern.permute.xlu0 0
      %153 = vperm.xlu0 %152, %v149
      %v154 = vpop.permute.xlu0 %153
      %v157 = vlaneseq
      %v158 = vshrl.u32 %v157, 7
      %v159 = vsub.s32 0, %v158
      %v160 = vrot.slane %v150, %v159
      %v162 = vadd.f32 %v154, %v160
      %v163 = vld [vmem:[#allocation2] sm:$0xff]
      %v164 = vmul.f32 %v163, 2.0
      %v165 = vsub.f32 %v162, %v164
      %v166 = vmax.f32 %v165, 0.0
      %v167 = vsub.f32 0.0, %v166
      %v168 = vmul.f32 %v167, 1.442695
      %v169 = vpow.pop %v168
      %170 = vst [vmem:[#allocation6] sm:$0xff] %v169
    $region29: #{tpu_custom_call.1} parent=1 // pred_fallthru
      _
    // Predicated region
    $region30: #{tpu_custom_call.1} parent=1 // pred_check
      _
    $region31: #{tpu_custom_call.1} parent=1 // pred_check_branch
      %172 = sbr.rel (0) target = $region33
    $region32: #{tpu_custom_call.1} parent=1 // pred_region
      %s174 = ssub.s32 128, 128
      %175 = vsyncadd [#allocation5], %s174
      %s177 = sshll.u32 [#allocation6], 4
      %s178 = int_to_ptr.vmem [resolvable:$true] %s177
      %180 = dma.vmem_to_hbm [thread:$0]  %s178, 128, %s4, [#allocation5]
    $region33: #{tpu_custom_call.1} parent=1 // pred_fallthru
      _
    // Predicated region
    $region34: #{tpu_custom_call.1} parent=1 // pred_check
      _
    $region35: #{tpu_custom_call.1} parent=1 // pred_check_branch
      %182 = sbr.rel (0) target = $region37
    $region36: #{tpu_custom_call.1} parent=1 // pred_region
      %183 = dma.done [#allocation5], 128
    $region37: #{tpu_custom_call.1} parent=1 // pred_fallthru
      _
    %184 = vsyncpa [#allocation4], 1
    %185 = vsyncpa [#allocation5], 1

</llo_original>
